<compile_context>
chip_gen: v7x
topology: tpu7x:2x2x1
jax: 0.10.0
libtpu: 0.0.40
codegen_flags: <defaults>
</compile_context>

<pallas_src>
import functools

import jax
import jax.numpy as jnp
from jax.experimental import pallas as pl
from jax.experimental.pallas import tpu as pltpu


def mlp_kernel(x_ref,
               w1_ref, b1_ref,
               w2_ref, b2_ref,
               w3_ref, b3_ref,
               w4_ref, b4_ref,
               w5_ref, b5_ref,
               o_ref):
    """Fused 5-layer MLP: (Linear+ReLU) x4 then Linear (lane-padded output)."""
    cdt = w1_ref.dtype  # MXU compute dtype (f32 default, bf16 on v6e/v7x)

    def layer(h, w_ref, b_ref, relu):
        # Matmul in compute dtype, accumulate in f32 on the MXU.
        acc = jnp.dot(h.astype(cdt), w_ref[...],
                      preferred_element_type=jnp.float32)
        # Explicit (hoisted) bias broadcast; bias stays f32.
        acc = acc + jnp.broadcast_to(b_ref[...], acc.shape)
        if relu:
            acc = jnp.maximum(acc, 0.0)
        return acc

    h = x_ref[...]
    h = layer(h, w1_ref, b1_ref, True)
    h = layer(h, w2_ref, b2_ref, True)
    h = layer(h, w3_ref, b3_ref, True)
    h = layer(h, w4_ref, b4_ref, True)
    h = layer(h, w5_ref, b5_ref, False)
    o_ref[...] = h.astype(o_ref.dtype)


def _round_up(x, m):
    return ((x + m - 1) // m) * m


@functools.partial(jax.jit, static_argnames=("block_m", "compute_dtype"))
def simple_nn_forward(x, params, *, block_m=256, compute_dtype=jnp.float32):
    """params = ((w1,b1),...,(w5,b5)); wi: (in,out), bi: (1,out)."""
    m, in_features = x.shape
    num_classes = params[-1][0].shape[1]

    # Lane-dense output: pad final layer to a multiple of 128 output columns
    # (zero-padded weights/bias, sliced off after the call).
    n_out = _round_up(num_classes, 128)

    # Pad batch to a sublane-aligned tile; pick an even grid over batch tiles
    # so dimension_semantics=("parallel",) can split work across TensorCores.
    m_pad = _round_up(m, 8)
    bm = min(block_m, m_pad)
    m_pad = _round_up(m_pad, bm)

    x_p = x
    if m_pad != m:
        x_p = jnp.pad(x_p, ((0, m_pad - m), (0, 0)))
    x_p = x_p.astype(compute_dtype)

    padded_params = []
    for li, (w, b) in enumerate(params):
        if li == len(params) - 1 and n_out != num_classes:
            w = jnp.pad(w, ((0, 0), (0, n_out - num_classes)))
            b = jnp.pad(b, ((0, 0), (0, n_out - num_classes)))
        padded_params.append((w.astype(compute_dtype), b.astype(jnp.float32)))

    grid = (m_pad // bm,)

    # x / output tile over batch; every (small) weight/bias block is the full array.
    x_spec = pl.BlockSpec((bm, in_features), lambda i: (i, 0))
    wb_specs = []
    for w, b in padded_params:
        wb_specs.append(pl.BlockSpec(w.shape, lambda i: (0, 0)))
        wb_specs.append(pl.BlockSpec(b.shape, lambda i: (0, 0)))
    out_spec = pl.BlockSpec((bm, n_out), lambda i: (i, 0))

    # Advisory cost estimate for XLA's scheduler.
    dims = [in_features] + [w.shape[1] for w, _ in padded_params]
    flops_per_row = 2 * sum(dims[i] * dims[i + 1] for i in range(len(dims) - 1))
    param_bytes = sum(int(w.size) * w.dtype.itemsize + int(b.size) * b.dtype.itemsize
                      for w, b in padded_params)
    bytes_accessed = (m_pad * in_features * jnp.dtype(compute_dtype).itemsize
                      + m_pad * n_out * 4 + param_bytes)
    cost = pl.CostEstimate(flops=m_pad * flops_per_row,
                           transcendentals=0,
                           bytes_accessed=bytes_accessed)

    flat_params = [a for wb in padded_params for a in wb]

    out = pl.pallas_call(
        mlp_kernel,
        out_shape=jax.ShapeDtypeStruct((m_pad, n_out), jnp.float32),
        grid=grid,
        in_specs=[x_spec] + wb_specs,
        out_specs=out_spec,
        compiler_params=pltpu.CompilerParams(
            dimension_semantics=("parallel",)),
        cost_estimate=cost,
    )(x_p, *flat_params)

    return out[:m, :num_classes]


def init_params(key, input_size, num_classes):
    """Deterministic init matching nn.Linear shapes (weights stored as (in,out))."""
    dims = [input_size, 64, 32, 16, 8, num_classes]
    params = []
    for i in range(5):
        fan_in, fan_out = dims[i], dims[i + 1]
        key, kw, kb = jax.random.split(key, 3)
        bound = 1.0 / jnp.sqrt(jnp.float32(fan_in))
        w = jax.random.uniform(kw, (fan_in, fan_out), jnp.float32, -bound, bound)
        b = jax.random.uniform(kb, (1, fan_out), jnp.float32, -bound, bound)
        params.append((w, b))
    return params


def reference_forward(x, params):
    h = x
    for i, (w, b) in enumerate(params):
        h = h @ w + b
        if i < 4:
            h = jnp.maximum(h, 0.0)
    return h


if __name__ == "__main__":
    input_size = 32
    num_classes = 10
    batch = 64  # small demo batch; block tile clamps to it automatically

    key = jax.random.PRNGKey(0)
    key, kx = jax.random.split(key)
    x = jax.random.normal(kx, (batch, input_size), jnp.float32)
    params = init_params(key, input_size, num_classes)

    ref = reference_forward(x, params)

    # Default f32 compute path (also the recommended dtype on v5e).
    out = jax.block_until_ready(simple_nn_forward(x, params))
    assert out.shape == (batch, num_classes)
    assert jnp.allclose(out, ref, atol=1e-4, rtol=1e-4), "f32 mismatch vs reference"

    # bf16 compute path (recommended on v6e/v7x: halves HBM bytes on the x stream).
    out_bf16 = jax.block_until_ready(
        simple_nn_forward(x, params, compute_dtype=jnp.bfloat16))
    assert out_bf16.shape == (batch, num_classes)
    assert jnp.allclose(out_bf16, ref, atol=1e-1, rtol=1e-1), "bf16 mismatch vs reference"

    print("KERNEL_OK")
</pallas_src>

<mosaic_0001>
module attributes {stable_mosaic.version = 11 : i64} {
  func.func @mlp_kernel(%arg0: i32, %arg1: memref<64x32xf32, #tpu.memory_space<vmem>>, %arg2: memref<32x64xf32, #tpu.memory_space<vmem>>, %arg3: memref<1x64xf32, #tpu.memory_space<vmem>>, %arg4: memref<64x32xf32, #tpu.memory_space<vmem>>, %arg5: memref<1x32xf32, #tpu.memory_space<vmem>>, %arg6: memref<32x16xf32, #tpu.memory_space<vmem>>, %arg7: memref<1x16xf32, #tpu.memory_space<vmem>>, %arg8: memref<16x8xf32, #tpu.memory_space<vmem>>, %arg9: memref<1x8xf32, #tpu.memory_space<vmem>>, %arg10: memref<8x128xf32, #tpu.memory_space<vmem>>, %arg11: memref<1x128xf32, #tpu.memory_space<vmem>>, %arg12: memref<64x128xf32, #tpu.memory_space<vmem>>) attributes {dimension_semantics = [#tpu.dimension_semantics<parallel>], iteration_bounds = array<i64: 1>, scalar_prefetch = 0 : i64, scratch_operands = 0 : i64, tpu.core_type = #tpu.core_type<tc>, window_params = [{transform_indices = @transform_0, window_bounds = array<i64: 64, 32>}, {pipeline_mode = #tpu.pipeline_mode<synchronous>, transform_indices = @transform_1, window_bounds = array<i64: 32, 64>}, {pipeline_mode = #tpu.pipeline_mode<synchronous>, transform_indices = @transform_2, window_bounds = array<i64: 1, 64>}, {pipeline_mode = #tpu.pipeline_mode<synchronous>, transform_indices = @transform_3, window_bounds = array<i64: 64, 32>}, {pipeline_mode = #tpu.pipeline_mode<synchronous>, transform_indices = @transform_4, window_bounds = array<i64: 1, 32>}, {pipeline_mode = #tpu.pipeline_mode<synchronous>, transform_indices = @transform_5, window_bounds = array<i64: 32, 16>}, {pipeline_mode = #tpu.pipeline_mode<synchronous>, transform_indices = @transform_6, window_bounds = array<i64: 1, 16>}, {pipeline_mode = #tpu.pipeline_mode<synchronous>, transform_indices = @transform_7, window_bounds = array<i64: 16, 8>}, {pipeline_mode = #tpu.pipeline_mode<synchronous>, transform_indices = @transform_8, window_bounds = array<i64: 1, 8>}, {pipeline_mode = #tpu.pipeline_mode<synchronous>, transform_indices = @transform_9, window_bounds = array<i64: 8, 128>}, {pipeline_mode = #tpu.pipeline_mode<synchronous>, transform_indices = @transform_10, window_bounds = array<i64: 1, 128>}, {transform_indices = @transform_11, window_bounds = array<i64: 64, 128>}]} {
    %c0 = arith.constant 0 : index
    %c0_0 = arith.constant 0 : index
    %0 = vector.load %arg1[%c0, %c0_0] : memref<64x32xf32, #tpu.memory_space<vmem>>, vector<64x32xf32>
    %c0_1 = arith.constant 0 : index
    %c0_2 = arith.constant 0 : index
    %1 = vector.load %arg2[%c0_1, %c0_2] : memref<32x64xf32, #tpu.memory_space<vmem>>, vector<32x64xf32>
    %cst = arith.constant dense<0.000000e+00> : vector<64x64xf32>
    %2 = tpu.matmul %0, %1, %cst {dimension_numbers = #tpu.dot_dimension_numbers<[1], [0], [0], [1], [0, 0, 1, 1], [], []>} : vector<64x32xf32>, vector<32x64xf32>, vector<64x64xf32> -> vector<64x64xf32>
    %c0_3 = arith.constant 0 : index
    %c0_4 = arith.constant 0 : index
    %3 = vector.load %arg3[%c0_3, %c0_4] : memref<1x64xf32, #tpu.memory_space<vmem>>, vector<1x64xf32>
    %4 = vector.shape_cast %3 : vector<1x64xf32> to vector<1x64xf32>
    %5 = vector.broadcast %4 : vector<1x64xf32> to vector<64x64xf32>
    %6 = arith.addf %2, %5 : vector<64x64xf32>
    %cst_5 = arith.constant 0.000000e+00 : f32
    %7 = vector.broadcast %cst_5 : f32 to vector<64x64xf32>
    %8 = arith.maximumf %6, %7 : vector<64x64xf32>
    %c0_6 = arith.constant 0 : index
    %c0_7 = arith.constant 0 : index
    %9 = vector.load %arg4[%c0_6, %c0_7] : memref<64x32xf32, #tpu.memory_space<vmem>>, vector<64x32xf32>
    %cst_8 = arith.constant dense<0.000000e+00> : vector<64x32xf32>
    %10 = tpu.matmul %8, %9, %cst_8 {dimension_numbers = #tpu.dot_dimension_numbers<[1], [0], [0], [1], [0, 0, 1, 1], [], []>} : vector<64x64xf32>, vector<64x32xf32>, vector<64x32xf32> -> vector<64x32xf32>
    %c0_9 = arith.constant 0 : index
    %c0_10 = arith.constant 0 : index
    %11 = vector.load %arg5[%c0_9, %c0_10] : memref<1x32xf32, #tpu.memory_space<vmem>>, vector<1x32xf32>
    %12 = vector.shape_cast %11 : vector<1x32xf32> to vector<1x32xf32>
    %13 = vector.broadcast %12 : vector<1x32xf32> to vector<64x32xf32>
    %14 = arith.addf %10, %13 : vector<64x32xf32>
    %cst_11 = arith.constant 0.000000e+00 : f32
    %15 = vector.broadcast %cst_11 : f32 to vector<64x32xf32>
    %16 = arith.maximumf %14, %15 : vector<64x32xf32>
    %c0_12 = arith.constant 0 : index
    %c0_13 = arith.constant 0 : index
    %17 = vector.load %arg6[%c0_12, %c0_13] : memref<32x16xf32, #tpu.memory_space<vmem>>, vector<32x16xf32>
    %cst_14 = arith.constant dense<0.000000e+00> : vector<64x16xf32>
    %18 = tpu.matmul %16, %17, %cst_14 {dimension_numbers = #tpu.dot_dimension_numbers<[1], [0], [0], [1], [0, 0, 1, 1], [], []>} : vector<64x32xf32>, vector<32x16xf32>, vector<64x16xf32> -> vector<64x16xf32>
    %c0_15 = arith.constant 0 : index
    %c0_16 = arith.constant 0 : index
    %19 = vector.load %arg7[%c0_15, %c0_16] : memref<1x16xf32, #tpu.memory_space<vmem>>, vector<1x16xf32>
    %20 = vector.shape_cast %19 : vector<1x16xf32> to vector<1x16xf32>
    %21 = vector.broadcast %20 : vector<1x16xf32> to vector<64x16xf32>
    %22 = arith.addf %18, %21 : vector<64x16xf32>
    %cst_17 = arith.constant 0.000000e+00 : f32
    %23 = vector.broadcast %cst_17 : f32 to vector<64x16xf32>
    %24 = arith.maximumf %22, %23 : vector<64x16xf32>
    %c0_18 = arith.constant 0 : index
    %c0_19 = arith.constant 0 : index
    %25 = vector.load %arg8[%c0_18, %c0_19] : memref<16x8xf32, #tpu.memory_space<vmem>>, vector<16x8xf32>
    %cst_20 = arith.constant dense<0.000000e+00> : vector<64x8xf32>
    %26 = tpu.matmul %24, %25, %cst_20 {dimension_numbers = #tpu.dot_dimension_numbers<[1], [0], [0], [1], [0, 0, 1, 1], [], []>} : vector<64x16xf32>, vector<16x8xf32>, vector<64x8xf32> -> vector<64x8xf32>
    %c0_21 = arith.constant 0 : index
    %c0_22 = arith.constant 0 : index
    %27 = vector.load %arg9[%c0_21, %c0_22] : memref<1x8xf32, #tpu.memory_space<vmem>>, vector<1x8xf32>
    %28 = vector.shape_cast %27 : vector<1x8xf32> to vector<1x8xf32>
    %29 = vector.broadcast %28 : vector<1x8xf32> to vector<64x8xf32>
    %30 = arith.addf %26, %29 : vector<64x8xf32>
    %cst_23 = arith.constant 0.000000e+00 : f32
    %31 = vector.broadcast %cst_23 : f32 to vector<64x8xf32>
    %32 = arith.maximumf %30, %31 : vector<64x8xf32>
    %c0_24 = arith.constant 0 : index
    %c0_25 = arith.constant 0 : index
    %33 = vector.load %arg10[%c0_24, %c0_25] : memref<8x128xf32, #tpu.memory_space<vmem>>, vector<8x128xf32>
    %cst_26 = arith.constant dense<0.000000e+00> : vector<64x128xf32>
    %34 = tpu.matmul %32, %33, %cst_26 {dimension_numbers = #tpu.dot_dimension_numbers<[1], [0], [0], [1], [0, 0, 1, 1], [], []>} : vector<64x8xf32>, vector<8x128xf32>, vector<64x128xf32> -> vector<64x128xf32>
    %c0_27 = arith.constant 0 : index
    %c0_28 = arith.constant 0 : index
    %35 = vector.load %arg11[%c0_27, %c0_28] : memref<1x128xf32, #tpu.memory_space<vmem>>, vector<1x128xf32>
    %36 = vector.shape_cast %35 : vector<1x128xf32> to vector<1x128xf32>
    %37 = vector.broadcast %36 : vector<1x128xf32> to vector<64x128xf32>
    %38 = arith.addf %34, %37 : vector<64x128xf32>
    %c0_29 = arith.constant 0 : index
    %c0_30 = arith.constant 0 : index
    %39 = vector.load %arg12[%c0_29, %c0_30] : memref<64x128xf32, #tpu.memory_space<vmem>>, vector<64x128xf32>
    tpu.vector_store %arg12[%c0_29, %c0_30], %38 {strides = array<i32>} : memref<64x128xf32, #tpu.memory_space<vmem>>, vector<64x128xf32>,
    return
  }
  func.func @transform_0(%arg0: i32) -> (i32, i32) {
    %c0_i32 = arith.constant 0 : i32
    %c0_i32_0 = arith.constant 0 : i32
    return %arg0, %c0_i32 : i32, i32
  }
  func.func @transform_1(%arg0: i32) -> (i32, i32) {
    %c0_i32 = arith.constant 0 : i32
    %c0_i32_0 = arith.constant 0 : i32
    %c0_i32_1 = arith.constant 0 : i32
    return %c0_i32, %c0_i32_0 : i32, i32
  }
  func.func @transform_2(%arg0: i32) -> (i32, i32) {
    %c0_i32 = arith.constant 0 : i32
    %c0_i32_0 = arith.constant 0 : i32
    %c0_i32_1 = arith.constant 0 : i32
    return %c0_i32, %c0_i32_0 : i32, i32
  }
  func.func @transform_3(%arg0: i32) -> (i32, i32) {
    %c0_i32 = arith.constant 0 : i32
    %c0_i32_0 = arith.constant 0 : i32
    %c0_i32_1 = arith.constant 0 : i32
    return %c0_i32, %c0_i32_0 : i32, i32
  }
  func.func @transform_4(%arg0: i32) -> (i32, i32) {
    %c0_i32 = arith.constant 0 : i32
    %c0_i32_0 = arith.constant 0 : i32
    %c0_i32_1 = arith.constant 0 : i32
    return %c0_i32, %c0_i32_0 : i32, i32
  }
  func.func @transform_5(%arg0: i32) -> (i32, i32) {
    %c0_i32 = arith.constant 0 : i32
    %c0_i32_0 = arith.constant 0 : i32
    %c0_i32_1 = arith.constant 0 : i32
    return %c0_i32, %c0_i32_0 : i32, i32
  }
  func.func @transform_6(%arg0: i32) -> (i32, i32) {
    %c0_i32 = arith.constant 0 : i32
    %c0_i32_0 = arith.constant 0 : i32
    %c0_i32_1 = arith.constant 0 : i32
    return %c0_i32, %c0_i32_0 : i32, i32
  }
  func.func @transform_7(%arg0: i32) -> (i32, i32) {
    %c0_i32 = arith.constant 0 : i32
    %c0_i32_0 = arith.constant 0 : i32
    %c0_i32_1 = arith.constant 0 : i32
    return %c0_i32, %c0_i32_0 : i32, i32
  }
  func.func @transform_8(%arg0: i32) -> (i32, i32) {
    %c0_i32 = arith.constant 0 : i32
    %c0_i32_0 = arith.constant 0 : i32
    %c0_i32_1 = arith.constant 0 : i32
    return %c0_i32, %c0_i32_0 : i32, i32
  }
  func.func @transform_9(%arg0: i32) -> (i32, i32) {
    %c0_i32 = arith.constant 0 : i32
    %c0_i32_0 = arith.constant 0 : i32
    %c0_i32_1 = arith.constant 0 : i32
    return %c0_i32, %c0_i32_0 : i32, i32
  }
  func.func @transform_10(%arg0: i32) -> (i32, i32) {
    %c0_i32 = arith.constant 0 : i32
    %c0_i32_0 = arith.constant 0 : i32
    %c0_i32_1 = arith.constant 0 : i32
    return %c0_i32, %c0_i32_0 : i32, i32
  }
  func.func @transform_11(%arg0: i32) -> (i32, i32) {
    %c0_i32 = arith.constant 0 : i32
    %c0_i32_0 = arith.constant 0 : i32
    return %arg0, %c0_i32 : i32, i32
  }
}

</mosaic_0001>

<llo_original>
// kernel: simple_nn_forward.1
$region0: #{simple_nn_forward.1}
  #allocation0 [shape = 'u32[]', space=smem, size = 0x4, offset = 0x4, fixed_abs, tag = 'smem constant byte address 0x4 - core index']
  #allocation1 [shape = 'u32[144,128]{1,0:T(1,128)}', space=vmem, size = 0x12000, scoped, tag = 'internal scratch']
  %s0 = inlined_call_operand.vmem [shape: f32[64,32], index: 0, kind: input, shape index: {}]
  %s1 = inlined_call_operand.vmem [shape: f32[32,64], index: 1, kind: input, shape index: {}]
  %s2 = inlined_call_operand.vmem [shape: f32[1,64], index: 2, kind: input, shape index: {}]
  %s3 = inlined_call_operand.vmem [shape: f32[64,32], index: 3, kind: input, shape index: {}]
  %s4 = inlined_call_operand.vmem [shape: f32[1,32], index: 4, kind: input, shape index: {}]
  %s5 = inlined_call_operand.vmem [shape: f32[32,16], index: 5, kind: input, shape index: {}]
  %s6 = inlined_call_operand.vmem [shape: f32[1,16], index: 6, kind: input, shape index: {}]
  %s7 = inlined_call_operand.vmem [shape: f32[16,8], index: 7, kind: input, shape index: {}]
  %s8 = inlined_call_operand.vmem [shape: f32[1,8], index: 8, kind: input, shape index: {}]
  %s9 = inlined_call_operand.vmem [shape: f32[8,128], index: 9, kind: input, shape index: {}]
  %s10 = inlined_call_operand.vmem [shape: f32[1,128], index: 10, kind: input, shape index: {}]
  %s11 = inlined_call_operand.vmem [shape: f32[64,128], index: 11, kind: output, shape index: {}]
  %s12 = sld [smem:[#allocation0]]
  $region54: #{simple_nn_forward.1} parent=0
    _
  %s14 = ssub.s32 1, %s12
  %s15 = scalar_select 0, %s14, %s12
  // Predicated region
  $region2: #{simple_nn_forward.1} parent=0 // pred_check
    _
  $region3: #{simple_nn_forward.1} parent=0 // pred_check_branch
    %17 = sbr.rel (0) target = $region5
  $region4: #{simple_nn_forward.1} parent=0 // pred_region
    _
  $region5: #{simple_nn_forward.1} parent=0 // pred_fallthru
    _
  // Predicated region
  $region6: #{simple_nn_forward.1} parent=0 // pred_check
    _
  $region7: #{simple_nn_forward.1} parent=0 // pred_check_branch
    %19 = sbr.rel (0) target = $region9
  $region8: #{simple_nn_forward.1} parent=0 // pred_region
    _
  $region9: #{simple_nn_forward.1} parent=0 // pred_fallthru
    _
  // Predicated region
  $region10: #{simple_nn_forward.1} parent=0 // pred_check
    _
  $region11: #{simple_nn_forward.1} parent=0 // pred_check_branch
    %21 = sbr.rel (0) target = $region13
  $region12: #{simple_nn_forward.1} parent=0 // pred_region
    _
  $region13: #{simple_nn_forward.1} parent=0 // pred_fallthru
    _
  // Predicated region
  $region14: #{simple_nn_forward.1} parent=0 // pred_check
    _
  $region15: #{simple_nn_forward.1} parent=0 // pred_check_branch
    %23 = sbr.rel (0) target = $region17
  $region16: #{simple_nn_forward.1} parent=0 // pred_region
    _
  $region17: #{simple_nn_forward.1} parent=0 // pred_fallthru
    _
  // Predicated region
  $region18: #{simple_nn_forward.1} parent=0 // pred_check
    _
  $region19: #{simple_nn_forward.1} parent=0 // pred_check_branch
    %25 = sbr.rel (0) target = $region21
  $region20: #{simple_nn_forward.1} parent=0 // pred_region
    _
  $region21: #{simple_nn_forward.1} parent=0 // pred_fallthru
    _
  // Predicated region
  $region22: #{simple_nn_forward.1} parent=0 // pred_check
    _
  $region23: #{simple_nn_forward.1} parent=0 // pred_check_branch
    %27 = sbr.rel (0) target = $region25
  $region24: #{simple_nn_forward.1} parent=0 // pred_region
    _
  $region25: #{simple_nn_forward.1} parent=0 // pred_fallthru
    _
  // Predicated region
  $region26: #{simple_nn_forward.1} parent=0 // pred_check
    _
  $region27: #{simple_nn_forward.1} parent=0 // pred_check_branch
    %29 = sbr.rel (0) target = $region29
  $region28: #{simple_nn_forward.1} parent=0 // pred_region
    _
  $region29: #{simple_nn_forward.1} parent=0 // pred_fallthru
    _
  // Predicated region
  $region30: #{simple_nn_forward.1} parent=0 // pred_check
    _
  $region31: #{simple_nn_forward.1} parent=0 // pred_check_branch
    %31 = sbr.rel (0) target = $region33
  $region32: #{simple_nn_forward.1} parent=0 // pred_region
    _
  $region33: #{simple_nn_forward.1} parent=0 // pred_fallthru
    _
  // Predicated region
  $region34: #{simple_nn_forward.1} parent=0 // pred_check
    _
  $region35: #{simple_nn_forward.1} parent=0 // pred_check_branch
    %33 = sbr.rel (0) target = $region37
  $region36: #{simple_nn_forward.1} parent=0 // pred_region
    _
  $region37: #{simple_nn_forward.1} parent=0 // pred_fallthru
    _
  // Predicated region
  $region38: #{simple_nn_forward.1} parent=0 // pred_check
    _
  $region39: #{simple_nn_forward.1} parent=0 // pred_check_branch
    %35 = sbr.rel (0) target = $region41
  $region40: #{simple_nn_forward.1} parent=0 // pred_region
    _
  $region41: #{simple_nn_forward.1} parent=0 // pred_fallthru
    _
  // Predicated region
  $region42: #{simple_nn_forward.1} parent=0 // pred_check
    _
  $region43: #{simple_nn_forward.1} parent=0 // pred_check_branch
    %37 = sbr.rel (0) target = $region45
  $region44: #{simple_nn_forward.1} parent=0 // pred_region
    _
  $region45: #{simple_nn_forward.1} parent=0 // pred_fallthru
    _
  %v38 = vld [vmem:[%s0] sm:$0xff]
  %v39 = vld [vmem:[%s0 + $0x8] sm:$0xff]
  %v40 = vld [vmem:[%s0 + $0x10] sm:$0xff]
  %v41 = vld [vmem:[%s0 + $0x18] sm:$0xff]
  %v42 = vld [vmem:[%s0 + $0x20] sm:$0xff]
  %v43 = vld [vmem:[%s0 + $0x28] sm:$0xff]
  %v44 = vld [vmem:[%s0 + $0x30] sm:$0xff]
  %v45 = vld [vmem:[%s0 + $0x38] sm:$0xff]
  %v46 = vld [vmem:[%s1] sm:$0xff]
  %v47 = vld [vmem:[%s1 + $0x8] sm:$0xff]
  %v48 = vld [vmem:[%s1 + $0x10] sm:$0xff]
  %v49 = vld [vmem:[%s1 + $0x18] sm:$0xff]
  %v50 = vld [vmem:[%s2] sm:$0x1]
  %v52 = vlaneseq
  %v53 = vshrl.u32 %v52, 7
  %v54 = vsub.s32 0, %v53
  %v55 = vrot.slane %v50, %v54
  %vm57 = vcmask 261120
  %v59 = vsel %vm57, %v38, 0
  %v62 = vsel %vm57, %v39, 0
  %v65 = vsel %vm57, %v40, 0
  %v68 = vsel %vm57, %v41, 0
  %v71 = vsel %vm57, %v42, 0
  %v74 = vsel %vm57, %v43, 0
  %v77 = vsel %vm57, %v44, 0
  %v80 = vsel %vm57, %v45, 0
  %82 = vmatprep.subr.mxu0 0.0
  %83 = vmatpush1.msra.mxu0 %v46
  %84 = vmatprep.subr.mxu0 0.0
  %85 = vmatpush1.msra.mxu0 %v47
  %86 = vmatprep.subr.mxu0 0.0
  %87 = vmatpush1.msra.mxu0 %v48
  %88 = vmatprep.subr.mxu0 0.0
  %89 = vmatpush1.msra.mxu0 %v49
  %90 = vmatprep.subr.mxu0 0.0
  %91 = vmatpush1.msra.mxu0 0.0
  %92 = vmatprep.subr.mxu0 0.0
  %93 = vmatpush1.msra.mxu0 0.0
  %94 = vmatprep.subr.mxu0 0.0
  %95 = vmatpush1.msra.mxu0 0.0
  %96 = vmatprep.subr.mxu0 0.0
  %97 = vmatpush1.msra.mxu0 0.0
  %98 = vmatprep.subr.mxu0 0.0
  %99 = vmatpush1.msra.mxu0 0.0
  %100 = vmatprep.subr.mxu0 0.0
  %101 = vmatpush1.msra.mxu0 0.0
  %102 = vmatprep.subr.mxu0 0.0
  %103 = vmatpush1.msra.mxu0 0.0
  %104 = vmatprep.subr.mxu0 0.0
  %105 = vmatpush1.msra.mxu0 0.0
  %106 = vmatprep.subr.mxu0 0.0
  %107 = vmatpush1.msra.mxu0 0.0
  %108 = vmatprep.subr.mxu0 0.0
  %109 = vmatpush1.msra.mxu0 0.0
  %110 = vmatprep.subr.mxu0 0.0
  %111 = vmatpush1.msra.mxu0 0.0
  %112 = vmatprep.subr.mxu0 0.0
  %113 = vmatpush1.msra.mxu0 0.0
  %114 = vmatprep.subr.mxu0 0.0
  %115 = vmatpush1.msra.mxu0 0.0
  %116 = vmatprep.subr.mxu0 0.0
  %117 = vmatpush1.msra.mxu0 0.0
  %118 = vmatprep.subr.mxu0 0.0
  %119 = vmatpush1.msra.mxu0 0.0
  %120 = vmatprep.subr.mxu0 0.0
  %121 = vmatpush1.msra.mxu0 0.0
  %122 = vmatprep.subr.mxu0 0.0
  %123 = vmatpush1.msra.mxu0 0.0
  %124 = vmatprep.subr.mxu0 0.0
  %125 = vmatpush1.msra.mxu0 0.0
  %126 = vmatprep.subr.mxu0 0.0
  %127 = vmatpush1.msra.mxu0 0.0
  %128 = vmatprep.subr.mxu0 0.0
  %129 = vmatpush1.msra.mxu0 0.0
  %130 = vmatprep.subr.mxu0 0.0
  %131 = vmatpush1.msra.mxu0 0.0
  %132 = vmatprep.subr.mxu0 0.0
  %133 = vmatpush1.msra.mxu0 0.0
  %134 = vmatprep.subr.mxu0 0.0
  %135 = vmatpush1.msra.mxu0 0.0
  %136 = vmatprep.subr.mxu0 0.0
  %137 = vmatpush1.msra.mxu0 0.0
  %138 = vmatprep.subr.mxu0 0.0
  %139 = vmatpush1.msra.mxu0 0.0
  %140 = vmatprep.subr.mxu0 0.0
  %141 = vmatpush1.msra.mxu0 0.0
  %142 = vmatprep.subr.mxu0 0.0
  %143 = vmatpush1.msra.mxu0 0.0
  %144 = vmatprep.subr.mxu0 0.0
  %145 = vmatpush1.msra.mxu0 0.0
  %146 = vmatprep.mubr.f32.mxu0 0.0
  %147 = vmatmul.mubr.f32.gmra.mrb[0].mxu0 %v59
  %v148 = vpop.f32.mrb[0].mxu0
  %v149 = vadd.f32 %v55, %v148
  %v150 = vpop.f32.mrb[0].mxu0
  %151 = vmatprep.mubr.f32.mxu0 0.0
  %152 = vmatmul.mubr.f32.gmra.mrb[0].mxu0 %v62
  %v153 = vpop.f32.mrb[0].mxu0
  %v154 = vadd.f32 %v55, %v153
  %v155 = vpop.f32.mrb[0].mxu0
  %156 = vmatprep.mubr.f32.mxu0 0.0
  %157 = vmatmul.mubr.f32.gmra.mrb[0].mxu0 %v65
  %v158 = vpop.f32.mrb[0].mxu0
  %v159 = vadd.f32 %v55, %v158
  %v160 = vpop.f32.mrb[0].mxu0
  %161 = vmatprep.mubr.f32.mxu0 0.0
  %162 = vmatmul.mubr.f32.gmra.mrb[0].mxu0 %v68
  %v163 = vpop.f32.mrb[0].mxu0
  %v164 = vadd.f32 %v55, %v163
  %v165 = vpop.f32.mrb[0].mxu0
  %166 = vmatprep.mubr.f32.mxu0 0.0
  %167 = vmatmul.mubr.f32.gmra.mrb[0].mxu0 %v71
  %v168 = vpop.f32.mrb[0].mxu0
  %v169 = vadd.f32 %v55, %v168
  %v170 = vpop.f32.mrb[0].mxu0
  %171 = vmatprep.mubr.f32.mxu0 0.0
  %172 = vmatmul.mubr.f32.gmra.mrb[0].mxu0 %v74
  %v173 = vpop.f32.mrb[0].mxu0
  %v174 = vadd.f32 %v55, %v173
  %v175 = vpop.f32.mrb[0].mxu0
  %176 = vmatprep.mubr.f32.mxu0 0.0
  %177 = vmatmul.mubr.f32.gmra.mrb[0].mxu0 %v77
  %v178 = vpop.f32.mrb[0].mxu0
  %v179 = vadd.f32 %v55, %v178
  %v180 = vpop.f32.mrb[0].mxu0
  %181 = vmatprep.mubr.f32.mxu0 0.0
  %182 = vmatmul.mubr.f32.gmra.mrb[0].mxu0 %v80
  %v183 = vpop.f32.mrb[0].mxu0
  %v184 = vadd.f32 %v55, %v183
  %v185 = vpop.f32.mrb[0].mxu0
  %186 = vdwg.mxu0
  %v187 = vmax.f32 %v149, 0.0
  %v188 = vmax.f32 %v154, 0.0
  %v189 = vmax.f32 %v159, 0.0
  %v190 = vmax.f32 %v164, 0.0
  %v191 = vmax.f32 %v169, 0.0
  %v192 = vmax.f32 %v174, 0.0
  %v193 = vmax.f32 %v179, 0.0
  %v194 = vmax.f32 %v184, 0.0
  %v195 = vld [vmem:[%s3] sm:$0xff]
  %v196 = vld [vmem:[%s3 + $0x8] sm:$0xff]
  %v197 = vld [vmem:[%s3 + $0x10] sm:$0xff]
  %v198 = vld [vmem:[%s3 + $0x18] sm:$0xff]
  %v199 = vld [vmem:[%s3 + $0x20] sm:$0xff]
  %v200 = vld [vmem:[%s3 + $0x28] sm:$0xff]
  %v201 = vld [vmem:[%s3 + $0x30] sm:$0xff]
  %v202 = vld [vmem:[%s3 + $0x38] sm:$0xff]
  %v203 = vld [vmem:[%s4] sm:$0x1]
  %v205 = vlaneseq
  %v206 = vshrl.u32 %v205, 7
  %v207 = vsub.s32 0, %v206
  %v208 = vrot.slane %v203, %v207
  %vm210 = vcmask 523264
  %v212 = vsel %vm210, %v187, 0
  %v215 = vsel %vm210, %v188, 0
  %v218 = vsel %vm210, %v189, 0
  %v221 = vsel %vm210, %v190, 0
  %v224 = vsel %vm210, %v191, 0
  %v227 = vsel %vm210, %v192, 0
  %v230 = vsel %vm210, %v193, 0
  %v233 = vsel %vm210, %v194, 0
  %235 = vmatprep.subr.mxu0 0.0
  %236 = vmatpush1.msra.mxu0 %v195
  %237 = vmatprep.subr.mxu0 0.0
  %238 = vmatpush1.msra.mxu0 %v196
  %239 = vmatprep.subr.mxu0 0.0
  %240 = vmatpush1.msra.mxu0 %v197
  %241 = vmatprep.subr.mxu0 0.0
  %242 = vmatpush1.msra.mxu0 %v198
  %243 = vmatprep.subr.mxu0 0.0
  %244 = vmatpush1.msra.mxu0 %v199
  %245 = vmatprep.subr.mxu0 0.0
  %246 = vmatpush1.msra.mxu0 %v200
  %247 = vmatprep.subr.mxu0 0.0
  %248 = vmatpush1.msra.mxu0 %v201
  %249 = vmatprep.subr.mxu0 0.0
  %250 = vmatpush1.msra.mxu0 %v202
  %251 = vmatprep.subr.mxu0 0.0
  %252 = vmatpush1.msra.mxu0 0.0
  %253 = vmatprep.subr.mxu0 0.0
  %254 = vmatpush1.msra.mxu0 0.0
  %255 = vmatprep.subr.mxu0 0.0
  %256 = vmatpush1.msra.mxu0 0.0
  %257 = vmatprep.subr.mxu0 0.0
  %258 = vmatpush1.msra.mxu0 0.0
  %259 = vmatprep.subr.mxu0 0.0
  %260 = vmatpush1.msra.mxu0 0.0
  %261 = vmatprep.subr.mxu0 0.0
  %262 = vmatpush1.msra.mxu0 0.0
  %263 = vmatprep.subr.mxu0 0.0
  %264 = vmatpush1.msra.mxu0 0.0
  %265 = vmatprep.subr.mxu0 0.0
  %266 = vmatpush1.msra.mxu0 0.0
  %267 = vmatprep.subr.mxu0 0.0
  %268 = vmatpush1.msra.mxu0 0.0
  %269 = vmatprep.subr.mxu0 0.0
  %270 = vmatpush1.msra.mxu0 0.0
  %271 = vmatprep.subr.mxu0 0.0
  %272 = vmatpush1.msra.mxu0 0.0
  %273 = vmatprep.subr.mxu0 0.0
  %274 = vmatpush1.msra.mxu0 0.0
  %275 = vmatprep.subr.mxu0 0.0
  %276 = vmatpush1.msra.mxu0 0.0
  %277 = vmatprep.subr.mxu0 0.0
  %278 = vmatpush1.msra.mxu0 0.0
  %279 = vmatprep.subr.mxu0 0.0
  %280 = vmatpush1.msra.mxu0 0.0
  %281 = vmatprep.subr.mxu0 0.0
  %282 = vmatpush1.msra.mxu0 0.0
  %283 = vmatprep.subr.mxu0 0.0
  %284 = vmatpush1.msra.mxu0 0.0
  %285 = vmatprep.subr.mxu0 0.0
  %286 = vmatpush1.msra.mxu0 0.0
  %287 = vmatprep.subr.mxu0 0.0
  %288 = vmatpush1.msra.mxu0 0.0
  %289 = vmatprep.subr.mxu0 0.0
  %290 = vmatpush1.msra.mxu0 0.0
  %291 = vmatprep.subr.mxu0 0.0
  %292 = vmatpush1.msra.mxu0 0.0
  %293 = vmatprep.subr.mxu0 0.0
  %294 = vmatpush1.msra.mxu0 0.0
  %295 = vmatprep.subr.mxu0 0.0
  %296 = vmatpush1.msra.mxu0 0.0
  %297 = vmatprep.subr.mxu0 0.0
  %298 = vmatpush1.msra.mxu0 0.0
  %299 = vmatprep.mubr.f32.mxu0 0.0
  %300 = vmatmul.mubr.f32.gmra.mrb[0].mxu0 %v212
  %v301 = vpop.f32.mrb[0].mxu0
  %v302 = vadd.f32 %v208, %v301
  %v303 = vpop.f32.mrb[0].mxu0
  %304 = vmatprep.mubr.f32.mxu0 0.0
  %305 = vmatmul.mubr.f32.gmra.mrb[0].mxu0 %v215
  %v306 = vpop.f32.mrb[0].mxu0
  %v307 = vadd.f32 %v208, %v306
  %v308 = vpop.f32.mrb[0].mxu0
  %309 = vmatprep.mubr.f32.mxu0 0.0
  %310 = vmatmul.mubr.f32.gmra.mrb[0].mxu0 %v218
  %v311 = vpop.f32.mrb[0].mxu0
  %v312 = vadd.f32 %v208, %v311
  %v313 = vpop.f32.mrb[0].mxu0
  %314 = vmatprep.mubr.f32.mxu0 0.0
  %315 = vmatmul.mubr.f32.gmra.mrb[0].mxu0 %v221
  %v316 = vpop.f32.mrb[0].mxu0
  %v317 = vadd.f32 %v208, %v316
  %v318 = vpop.f32.mrb[0].mxu0
  %319 = vmatprep.mubr.f32.mxu0 0.0
  %320 = vmatmul.mubr.f32.gmra.mrb[0].mxu0 %v224
  %v321 = vpop.f32.mrb[0].mxu0
  %v322 = vadd.f32 %v208, %v321
  %v323 = vpop.f32.mrb[0].mxu0
  %324 = vmatprep.mubr.f32.mxu0 0.0
  %325 = vmatmul.mubr.f32.gmra.mrb[0].mxu0 %v227
  %v326 = vpop.f32.mrb[0].mxu0
  %v327 = vadd.f32 %v208, %v326
  %v328 = vpop.f32.mrb[0].mxu0
  %329 = vmatprep.mubr.f32.mxu0 0.0
  %330 = vmatmul.mubr.f32.gmra.mrb[0].mxu0 %v230
  %v331 = vpop.f32.mrb[0].mxu0
  %v332 = vadd.f32 %v208, %v331
  %v333 = vpop.f32.mrb[0].mxu0
  %334 = vmatprep.mubr.f32.mxu0 0.0
  %335 = vmatmul.mubr.f32.gmra.mrb[0].mxu0 %v233
  %v336 = vpop.f32.mrb[0].mxu0
  %v337 = vadd.f32 %v208, %v336
  %v338 = vpop.f32.mrb[0].mxu0
  %339 = vdwg.mxu0
  %v340 = vmax.f32 %v302, 0.0
  %v341 = vmax.f32 %v307, 0.0
  %v342 = vmax.f32 %v312, 0.0
  %v343 = vmax.f32 %v317, 0.0
  %v344 = vmax.f32 %v322, 0.0
  %v345 = vmax.f32 %v327, 0.0
  %v346 = vmax.f32 %v332, 0.0
  %v347 = vmax.f32 %v337, 0.0
  %v348 = vld [vmem:[%s5] sm:$0xff]
  %v349 = vld [vmem:[%s5 + $0x8] sm:$0xff]
  %v350 = vld [vmem:[%s5 + $0x10] sm:$0xff]
  %v351 = vld [vmem:[%s5 + $0x18] sm:$0xff]
  %v352 = vld [vmem:[%s6] sm:$0x1]
  %v354 = vlaneseq
  %v355 = vshrl.u32 %v354, 7
  %v356 = vsub.s32 0, %v355
  %v357 = vrot.slane %v352, %v356
  %v360 = vsel %vm57, %v340, 0
  %v363 = vsel %vm57, %v341, 0
  %v366 = vsel %vm57, %v342, 0
  %v369 = vsel %vm57, %v343, 0
  %v372 = vsel %vm57, %v344, 0
  %v375 = vsel %vm57, %v345, 0
  %v378 = vsel %vm57, %v346, 0
  %v381 = vsel %vm57, %v347, 0
  %383 = vmatprep.subr.mxu0 0.0
  %384 = vmatpush1.msra.mxu0 %v348
  %385 = vmatprep.subr.mxu0 0.0
  %386 = vmatpush1.msra.mxu0 %v349
  %387 = vmatprep.subr.mxu0 0.0
  %388 = vmatpush1.msra.mxu0 %v350
  %389 = vmatprep.subr.mxu0 0.0
  %390 = vmatpush1.msra.mxu0 %v351
  %391 = vmatprep.subr.mxu0 0.0
  %392 = vmatpush1.msra.mxu0 0.0
  %393 = vmatprep.subr.mxu0 0.0
  %394 = vmatpush1.msra.mxu0 0.0
  %395 = vmatprep.subr.mxu0 0.0
  %396 = vmatpush1.msra.mxu0 0.0
  %397 = vmatprep.subr.mxu0 0.0
  %398 = vmatpush1.msra.mxu0 0.0
  %399 = vmatprep.subr.mxu0 0.0
  %400 = vmatpush1.msra.mxu0 0.0
  %401 = vmatprep.subr.mxu0 0.0
  %402 = vmatpush1.msra.mxu0 0.0
  %403 = vmatprep.subr.mxu0 0.0
  %404 = vmatpush1.msra.mxu0 0.0
  %405 = vmatprep.subr.mxu0 0.0
  %406 = vmatpush1.msra.mxu0 0.0
  %407 = vmatprep.subr.mxu0 0.0
  %408 = vmatpush1.msra.mxu0 0.0
  %409 = vmatprep.subr.mxu0 0.0
  %410 = vmatpush1.msra.mxu0 0.0
  %411 = vmatprep.subr.mxu0 0.0
  %412 = vmatpush1.msra.mxu0 0.0
  %413 = vmatprep.subr.mxu0 0.0
  %414 = vmatpush1.msra.mxu0 0.0
  %415 = vmatprep.subr.mxu0 0.0
  %416 = vmatpush1.msra.mxu0 0.0
  %417 = vmatprep.subr.mxu0 0.0
  %418 = vmatpush1.msra.mxu0 0.0
  %419 = vmatprep.subr.mxu0 0.0
  %420 = vmatpush1.msra.mxu0 0.0
  %421 = vmatprep.subr.mxu0 0.0
  %422 = vmatpush1.msra.mxu0 0.0
  %423 = vmatprep.subr.mxu0 0.0
  %424 = vmatpush1.msra.mxu0 0.0
  %425 = vmatprep.subr.mxu0 0.0
  %426 = vmatpush1.msra.mxu0 0.0
  %427 = vmatprep.subr.mxu0 0.0
  %428 = vmatpush1.msra.mxu0 0.0
  %429 = vmatprep.subr.mxu0 0.0
  %430 = vmatpush1.msra.mxu0 0.0
  %431 = vmatprep.subr.mxu0 0.0
  %432 = vmatpush1.msra.mxu0 0.0
  %433 = vmatprep.subr.mxu0 0.0
  %434 = vmatpush1.msra.mxu0 0.0
  %435 = vmatprep.subr.mxu0 0.0
  %436 = vmatpush1.msra.mxu0 0.0
  %437 = vmatprep.subr.mxu0 0.0
  %438 = vmatpush1.msra.mxu0 0.0
  %439 = vmatprep.subr.mxu0 0.0
  %440 = vmatpush1.msra.mxu0 0.0
  %441 = vmatprep.subr.mxu0 0.0
  %442 = vmatpush1.msra.mxu0 0.0
  %443 = vmatprep.subr.mxu0 0.0
  %444 = vmatpush1.msra.mxu0 0.0
  %445 = vmatprep.subr.mxu0 0.0
  %446 = vmatpush1.msra.mxu0 0.0
  %447 = vmatprep.mubr.f32.mxu0 0.0
  %448 = vmatmul.mubr.f32.gmra.mrb[0].mxu0 %v360
  %v449 = vpop.f32.mrb[0].mxu0
  %v450 = vadd.f32 %v357, %v449
  %v451 = vpop.f32.mrb[0].mxu0
  %452 = vmatprep.mubr.f32.mxu0 0.0
  %453 = vmatmul.mubr.f32.gmra.mrb[0].mxu0 %v363
  %v454 = vpop.f32.mrb[0].mxu0
  %v455 = vadd.f32 %v357, %v454
  %v456 = vpop.f32.mrb[0].mxu0
  %457 = vmatprep.mubr.f32.mxu0 0.0
  %458 = vmatmul.mubr.f32.gmra.mrb[0].mxu0 %v366
  %v459 = vpop.f32.mrb[0].mxu0
  %v460 = vadd.f32 %v357, %v459
  %v461 = vpop.f32.mrb[0].mxu0
  %462 = vmatprep.mubr.f32.mxu0 0.0
  %463 = vmatmul.mubr.f32.gmra.mrb[0].mxu0 %v369
  %v464 = vpop.f32.mrb[0].mxu0
  %v465 = vadd.f32 %v357, %v464
  %v466 = vpop.f32.mrb[0].mxu0
  %467 = vmatprep.mubr.f32.mxu0 0.0
  %468 = vmatmul.mubr.f32.gmra.mrb[0].mxu0 %v372
  %v469 = vpop.f32.mrb[0].mxu0
  %v470 = vadd.f32 %v357, %v469
  %v471 = vpop.f32.mrb[0].mxu0
  %472 = vmatprep.mubr.f32.mxu0 0.0
  %473 = vmatmul.mubr.f32.gmra.mrb[0].mxu0 %v375
  %v474 = vpop.f32.mrb[0].mxu0
  %v475 = vadd.f32 %v357, %v474
  %v476 = vpop.f32.mrb[0].mxu0
  %477 = vmatprep.mubr.f32.mxu0 0.0
  %478 = vmatmul.mubr.f32.gmra.mrb[0].mxu0 %v378
  %v479 = vpop.f32.mrb[0].mxu0
  %v480 = vadd.f32 %v357, %v479
  %v481 = vpop.f32.mrb[0].mxu0
  %482 = vmatprep.mubr.f32.mxu0 0.0
  %483 = vmatmul.mubr.f32.gmra.mrb[0].mxu0 %v381
  %v484 = vpop.f32.mrb[0].mxu0
  %v485 = vadd.f32 %v357, %v484
  %v486 = vpop.f32.mrb[0].mxu0
  %487 = vdwg.mxu0
  %v488 = vmax.f32 %v450, 0.0
  %v489 = vmax.f32 %v455, 0.0
  %v490 = vmax.f32 %v460, 0.0
  %v491 = vmax.f32 %v465, 0.0
  %v492 = vmax.f32 %v470, 0.0
  %v493 = vmax.f32 %v475, 0.0
  %v494 = vmax.f32 %v480, 0.0
  %v495 = vmax.f32 %v485, 0.0
  %v496 = vld [vmem:[%s7] sm:$0xff]
  %v497 = vld [vmem:[%s7 + $0x8] sm:$0xff]
  %v498 = vld [vmem:[%s8] sm:$0x1]
  %v500 = vlaneseq
  %v501 = vshrl.u32 %v500, 7
  %v502 = vsub.s32 0, %v501
  %v503 = vrot.slane %v498, %v502
  %vm505 = vcmask 130048
  %v507 = vsel %vm505, %v488, 0
  %v510 = vsel %vm505, %v489, 0
  %v513 = vsel %vm505, %v490, 0
  %v516 = vsel %vm505, %v491, 0
  %v519 = vsel %vm505, %v492, 0
  %v522 = vsel %vm505, %v493, 0
  %v525 = vsel %vm505, %v494, 0
  %v528 = vsel %vm505, %v495, 0
  %530 = vmatprep.subr.mxu0 0.0
  %531 = vmatpush1.msra.mxu0 %v496
  %532 = vmatprep.subr.mxu0 0.0
  %533 = vmatpush1.msra.mxu0 %v497
  %534 = vmatprep.subr.mxu0 0.0
  %535 = vmatpush1.msra.mxu0 0.0
  %536 = vmatprep.subr.mxu0 0.0
  %537 = vmatpush1.msra.mxu0 0.0
  %538 = vmatprep.subr.mxu0 0.0
  %539 = vmatpush1.msra.mxu0 0.0
  %540 = vmatprep.subr.mxu0 0.0
  %541 = vmatpush1.msra.mxu0 0.0
  %542 = vmatprep.subr.mxu0 0.0
  %543 = vmatpush1.msra.mxu0 0.0
  %544 = vmatprep.subr.mxu0 0.0
  %545 = vmatpush1.msra.mxu0 0.0
  %546 = vmatprep.subr.mxu0 0.0
  %547 = vmatpush1.msra.mxu0 0.0
  %548 = vmatprep.subr.mxu0 0.0
  %549 = vmatpush1.msra.mxu0 0.0
  %550 = vmatprep.subr.mxu0 0.0
  %551 = vmatpush1.msra.mxu0 0.0
  %552 = vmatprep.subr.mxu0 0.0
  %553 = vmatpush1.msra.mxu0 0.0
  %554 = vmatprep.subr.mxu0 0.0
  %555 = vmatpush1.msra.mxu0 0.0
  %556 = vmatprep.subr.mxu0 0.0
  %557 = vmatpush1.msra.mxu0 0.0
  %558 = vmatprep.subr.mxu0 0.0
  %559 = vmatpush1.msra.mxu0 0.0
  %560 = vmatprep.subr.mxu0 0.0
  %561 = vmatpush1.msra.mxu0 0.0
  %562 = vmatprep.subr.mxu0 0.0
  %563 = vmatpush1.msra.mxu0 0.0
  %564 = vmatprep.subr.mxu0 0.0
  %565 = vmatpush1.msra.mxu0 0.0
  %566 = vmatprep.subr.mxu0 0.0
  %567 = vmatpush1.msra.mxu0 0.0
  %568 = vmatprep.subr.mxu0 0.0
  %569 = vmatpush1.msra.mxu0 0.0
  %570 = vmatprep.subr.mxu0 0.0
  %571 = vmatpush1.msra.mxu0 0.0
  %572 = vmatprep.subr.mxu0 0.0
  %573 = vmatpush1.msra.mxu0 0.0
  %574 = vmatprep.subr.mxu0 0.0
  %575 = vmatpush1.msra.mxu0 0.0
  %576 = vmatprep.subr.mxu0 0.0
  %577 = vmatpush1.msra.mxu0 0.0
  %578 = vmatprep.subr.mxu0 0.0
  %579 = vmatpush1.msra.mxu0 0.0
  %580 = vmatprep.subr.mxu0 0.0
  %581 = vmatpush1.msra.mxu0 0.0
  %582 = vmatprep.subr.mxu0 0.0
  %583 = vmatpush1.msra.mxu0 0.0
  %584 = vmatprep.subr.mxu0 0.0
  %585 = vmatpush1.msra.mxu0 0.0
  %586 = vmatprep.subr.mxu0 0.0
  %587 = vmatpush1.msra.mxu0 0.0
  %588 = vmatprep.subr.mxu0 0.0
  %589 = vmatpush1.msra.mxu0 0.0
  %590 = vmatprep.subr.mxu0 0.0
  %591 = vmatpush1.msra.mxu0 0.0
  %592 = vmatprep.subr.mxu0 0.0
  %593 = vmatpush1.msra.mxu0 0.0
  %594 = vmatprep.mubr.f32.mxu0 0.0
  %595 = vmatmul.mubr.f32.gmra.mrb[0].mxu0 %v507
  %v596 = vpop.f32.mrb[0].mxu0
  %v597 = vadd.f32 %v503, %v596
  %v598 = vpop.f32.mrb[0].mxu0
  %599 = vmatprep.mubr.f32.mxu0 0.0
  %600 = vmatmul.mubr.f32.gmra.mrb[0].mxu0 %v510
  %v601 = vpop.f32.mrb[0].mxu0
  %v602 = vadd.f32 %v503, %v601
  %v603 = vpop.f32.mrb[0].mxu0
  %604 = vmatprep.mubr.f32.mxu0 0.0
  %605 = vmatmul.mubr.f32.gmra.mrb[0].mxu0 %v513
  %v606 = vpop.f32.mrb[0].mxu0
  %v607 = vadd.f32 %v503, %v606
  %v608 = vpop.f32.mrb[0].mxu0
  %609 = vmatprep.mubr.f32.mxu0 0.0
  %610 = vmatmul.mubr.f32.gmra.mrb[0].mxu0 %v516
  %v611 = vpop.f32.mrb[0].mxu0
  %v612 = vadd.f32 %v503, %v611
  %v613 = vpop.f32.mrb[0].mxu0
  %614 = vmatprep.mubr.f32.mxu0 0.0
  %615 = vmatmul.mubr.f32.gmra.mrb[0].mxu0 %v519
  %v616 = vpop.f32.mrb[0].mxu0
  %v617 = vadd.f32 %v503, %v616
  %v618 = vpop.f32.mrb[0].mxu0
  %619 = vmatprep.mubr.f32.mxu0 0.0
  %620 = vmatmul.mubr.f32.gmra.mrb[0].mxu0 %v522
  %v621 = vpop.f32.mrb[0].mxu0
  %v622 = vadd.f32 %v503, %v621
  %v623 = vpop.f32.mrb[0].mxu0
  %624 = vmatprep.mubr.f32.mxu0 0.0
  %625 = vmatmul.mubr.f32.gmra.mrb[0].mxu0 %v525
  %v626 = vpop.f32.mrb[0].mxu0
  %v627 = vadd.f32 %v503, %v626
  %v628 = vpop.f32.mrb[0].mxu0
  %629 = vmatprep.mubr.f32.mxu0 0.0
  %630 = vmatmul.mubr.f32.gmra.mrb[0].mxu0 %v528
  %v631 = vpop.f32.mrb[0].mxu0
  %v632 = vadd.f32 %v503, %v631
  %v633 = vpop.f32.mrb[0].mxu0
  %634 = vdwg.mxu0
  %v635 = vmax.f32 %v597, 0.0
  %v636 = vmax.f32 %v602, 0.0
  %v637 = vmax.f32 %v607, 0.0
  %v638 = vmax.f32 %v612, 0.0
  %v639 = vmax.f32 %v617, 0.0
  %v640 = vmax.f32 %v622, 0.0
  %v641 = vmax.f32 %v627, 0.0
  %v642 = vmax.f32 %v632, 0.0
  %v643 = vld [vmem:[%s9] sm:$0xff]
  %v644 = vld [vmem:[%s10] sm:$0x1]
  %v646 = vlaneseq
  %v647 = vshrl.u32 %v646, 7
  %v648 = vsub.s32 0, %v647
  %v649 = vrot.slane %v644, %v648
  %vm651 = vcmask 64512
  %v653 = vsel %vm651, %v635, 0
  %v656 = vsel %vm651, %v636, 0
  %v659 = vsel %vm651, %v637, 0
  %v662 = vsel %vm651, %v638, 0
  %v665 = vsel %vm651, %v639, 0
  %v668 = vsel %vm651, %v640, 0
  %v671 = vsel %vm651, %v641, 0
  %v674 = vsel %vm651, %v642, 0
  %676 = vmatprep.subr.mxu0 0.0
  %677 = vmatpush1.msra.mxu0 %v643
  %678 = vmatprep.subr.mxu0 0.0
  %679 = vmatpush1.msra.mxu0 0.0
  %680 = vmatprep.subr.mxu0 0.0
  %681 = vmatpush1.msra.mxu0 0.0
  %682 = vmatprep.subr.mxu0 0.0
  %683 = vmatpush1.msra.mxu0 0.0
  %684 = vmatprep.subr.mxu0 0.0
  %685 = vmatpush1.msra.mxu0 0.0
  %686 = vmatprep.subr.mxu0 0.0
  %687 = vmatpush1.msra.mxu0 0.0
  %688 = vmatprep.subr.mxu0 0.0
  %689 = vmatpush1.msra.mxu0 0.0
  %690 = vmatprep.subr.mxu0 0.0
  %691 = vmatpush1.msra.mxu0 0.0
  %692 = vmatprep.subr.mxu0 0.0
  %693 = vmatpush1.msra.mxu0 0.0
  %694 = vmatprep.subr.mxu0 0.0
  %695 = vmatpush1.msra.mxu0 0.0
  %696 = vmatprep.subr.mxu0 0.0
  %697 = vmatpush1.msra.mxu0 0.0
  %698 = vmatprep.subr.mxu0 0.0
  %699 = vmatpush1.msra.mxu0 0.0
  %700 = vmatprep.subr.mxu0 0.0
  %701 = vmatpush1.msra.mxu0 0.0
  %702 = vmatprep.subr.mxu0 0.0
  %703 = vmatpush1.msra.mxu0 0.0
  %704 = vmatprep.subr.mxu0 0.0
  %705 = vmatpush1.msra.mxu0 0.0
  %706 = vmatprep.subr.mxu0 0.0
  %707 = vmatpush1.msra.mxu0 0.0
  %708 = vmatprep.subr.mxu0 0.0
  %709 = vmatpush1.msra.mxu0 0.0
  %710 = vmatprep.subr.mxu0 0.0
  %711 = vmatpush1.msra.mxu0 0.0
  %712 = vmatprep.subr.mxu0 0.0
  %713 = vmatpush1.msra.mxu0 0.0
  %714 = vmatprep.subr.mxu0 0.0
  %715 = vmatpush1.msra.mxu0 0.0
  %716 = vmatprep.subr.mxu0 0.0
  %717 = vmatpush1.msra.mxu0 0.0
  %718 = vmatprep.subr.mxu0 0.0
  %719 = vmatpush1.msra.mxu0 0.0
  %720 = vmatprep.subr.mxu0 0.0
  %721 = vmatpush1.msra.mxu0 0.0
  %722 = vmatprep.subr.mxu0 0.0
  %723 = vmatpush1.msra.mxu0 0.0
  %724 = vmatprep.subr.mxu0 0.0
  %725 = vmatpush1.msra.mxu0 0.0
  %726 = vmatprep.subr.mxu0 0.0
  %727 = vmatpush1.msra.mxu0 0.0
  %728 = vmatprep.subr.mxu0 0.0
  %729 = vmatpush1.msra.mxu0 0.0
  %730 = vmatprep.subr.mxu0 0.0
  %731 = vmatpush1.msra.mxu0 0.0
  %732 = vmatprep.subr.mxu0 0.0
  %733 = vmatpush1.msra.mxu0 0.0
  %734 = vmatprep.subr.mxu0 0.0
  %735 = vmatpush1.msra.mxu0 0.0
  %736 = vmatprep.subr.mxu0 0.0
  %737 = vmatpush1.msra.mxu0 0.0
  %738 = vmatprep.subr.mxu0 0.0
  %739 = vmatpush1.msra.mxu0 0.0
  %740 = vmatprep.mubr.f32.mxu0 0.0
  %741 = vmatmul.mubr.f32.gmra.mrb[0].mxu0 %v653
  %v742 = vpop.f32.mrb[0].mxu0
  %v743 = vadd.f32 %v649, %v742
  %v744 = vpop.f32.mrb[0].mxu0
  %745 = vmatprep.mubr.f32.mxu0 0.0
  %746 = vmatmul.mubr.f32.gmra.mrb[0].mxu0 %v656
  %v747 = vpop.f32.mrb[0].mxu0
  %v748 = vadd.f32 %v649, %v747
  %v749 = vpop.f32.mrb[0].mxu0
  %750 = vmatprep.mubr.f32.mxu0 0.0
  %751 = vmatmul.mubr.f32.gmra.mrb[0].mxu0 %v659
  %v752 = vpop.f32.mrb[0].mxu0
  %v753 = vadd.f32 %v649, %v752
  %v754 = vpop.f32.mrb[0].mxu0
  %755 = vmatprep.mubr.f32.mxu0 0.0
  %756 = vmatmul.mubr.f32.gmra.mrb[0].mxu0 %v662
  %v757 = vpop.f32.mrb[0].mxu0
  %v758 = vadd.f32 %v649, %v757
  %v759 = vpop.f32.mrb[0].mxu0
  %760 = vmatprep.mubr.f32.mxu0 0.0
  %761 = vmatmul.mubr.f32.gmra.mrb[0].mxu0 %v665
  %v762 = vpop.f32.mrb[0].mxu0
  %v763 = vadd.f32 %v649, %v762
  %v764 = vpop.f32.mrb[0].mxu0
  %765 = vmatprep.mubr.f32.mxu0 0.0
  %766 = vmatmul.mubr.f32.gmra.mrb[0].mxu0 %v668
  %v767 = vpop.f32.mrb[0].mxu0
  %v768 = vadd.f32 %v649, %v767
  %v769 = vpop.f32.mrb[0].mxu0
  %770 = vmatprep.mubr.f32.mxu0 0.0
  %771 = vmatmul.mubr.f32.gmra.mrb[0].mxu0 %v671
  %v772 = vpop.f32.mrb[0].mxu0
  %v773 = vadd.f32 %v649, %v772
  %v774 = vpop.f32.mrb[0].mxu0
  %775 = vmatprep.mubr.f32.mxu0 0.0
  %776 = vmatmul.mubr.f32.gmra.mrb[0].mxu0 %v674
  %v777 = vpop.f32.mrb[0].mxu0
  %v778 = vadd.f32 %v649, %v777
  %v779 = vpop.f32.mrb[0].mxu0
  %780 = vdwg.mxu0
  %781 = vst [vmem:[%s11] sm:$0xff] %v743
  %782 = vst [vmem:[%s11 + $0x8] sm:$0xff] %v748
  %783 = vst [vmem:[%s11 + $0x10] sm:$0xff] %v753
  %784 = vst [vmem:[%s11 + $0x18] sm:$0xff] %v758
  %785 = vst [vmem:[%s11 + $0x20] sm:$0xff] %v763
  %786 = vst [vmem:[%s11 + $0x28] sm:$0xff] %v768
  %787 = vst [vmem:[%s11 + $0x30] sm:$0xff] %v773
  %788 = vst [vmem:[%s11 + $0x38] sm:$0xff] %v778
  // Predicated region
  $region46: #{simple_nn_forward.1} parent=0 // pred_check
    _
  $region47: #{simple_nn_forward.1} parent=0 // pred_check_branch
    %790 = sbr.rel (0) target = $region49
  $region48: #{simple_nn_forward.1} parent=0 // pred_region
    _
  $region49: #{simple_nn_forward.1} parent=0 // pred_fallthru
    _
  // Predicated region
  $region50: #{simple_nn_forward.1} parent=0 // pred_check
    _
  $region51: #{simple_nn_forward.1} parent=0 // pred_check_branch
    %792 = sbr.rel (0) target = $region53
  $region52: #{simple_nn_forward.1} parent=0 // pred_region
    _
  $region53: #{simple_nn_forward.1} parent=0 // pred_fallthru
    _

</llo_original>
